<compile_context>
chip_gen: v7x
topology: tpu7x:2x2x1
jax: 0.10.0
libtpu: 0.0.40
codegen_flags: <defaults>
</compile_context>

<pallas_src>
import functools

import numpy as np

import jax
import jax.numpy as jnp
from jax import lax
from jax.experimental import pallas as pl
from jax.experimental.pallas import tpu as pltpu  # noqa: F401  (TPU backend)

# ----- model hyper-parameters (small, consistent with the module) -----------
N = 2          # batch
L = 16         # query sequence length
S = 16         # source (key/value) sequence length
D_MODEL = 32   # d_model
NHEAD = 4      # number of heads
HEAD_DIM = D_MODEL // NHEAD

LN_EPS = 1e-5        # nn.LayerNorm default eps
ATTN_EPS = 1e-6      # LinearAttention eps


def _elu_plus_one(x):
    # elu(x, alpha=1) + 1
    return jnp.where(x > 0, x + 1.0, jnp.exp(x))


def _layer_norm(y, gamma, beta):
    mu = jnp.mean(y, axis=-1, keepdims=True)
    var = jnp.mean((y - mu) ** 2, axis=-1, keepdims=True)
    return (y - mu) * lax.rsqrt(var + LN_EPS) * gamma + beta


def _block_diag_rows(a, n, rows_per, c):
    """[n*rows_per, c] -> [n*rows_per, n*c] batch-block-diagonal layout."""
    zeros = jnp.zeros((rows_per, c), a.dtype)
    out_rows = []
    for b in range(n):
        row = [zeros] * n
        row[b] = a[b * rows_per:(b + 1) * rows_per, :]
        out_rows.append(jnp.concatenate(row, axis=1))
    return jnp.concatenate(out_rows, axis=0)


def loftr_kernel(n, l, s, rows_ref, w_ref, o_ref):
    c = rows_ref.shape[-1]
    nl = n * l
    ns = n * s

    rows = rows_ref[...]          # [n*l + n*s, c]   ([x ; source])
    w = w_ref[...]                # [3c, 4c] packed parameter slab

    # ---- static slab slices (layout built in the wrapper) -------------------
    w1 = w[0:2 * c, 0:2 * c]                    # [2c, 2c]  mlp fc1
    w2 = w[0:2 * c, 2 * c:3 * c]                # [2c, c]   mlp fc2
    wm = w[0:c, 3 * c:4 * c]                    # [c, c]    merge
    hm = w[c:2 * c, 3 * c:4 * c]                # [c, c]    head block-diag mask
    w_qkv = w[2 * c:3 * c, 0:3 * c]             # [c, 3c]   [wq | wk | wv]
    lnp = w[2 * c:2 * c + 4, 3 * c:4 * c]       # [4, c]    g1, b1, g2, b2
    g1, b1, g2, b2 = lnp[0:1, :], lnp[1:2, :], lnp[2:3, :], lnp[3:4, :]

    x = rows[0:nl, :]                           # [n*l, c]

    # ---- fused q/k/v projection: ONE MXU matmul over [x ; src] --------------
    proj = jnp.dot(rows, w_qkv, preferred_element_type=jnp.float32)   # [nl+ns, 3c]
    q = proj[0:nl, 0:c]                         # x rows    x wq cols
    k = proj[nl:nl + ns, c:2 * c]               # src rows  x wk cols
    v = proj[nl:nl + ns, 2 * c:3 * c]           # src rows  x wv cols
    # (the two unused quadrants of `proj` are discarded — free on an idle MXU)

    # ---- linear-attention feature map (VPU/EUP) ------------------------------
    qf = _elu_plus_one(q)                       # [n*l, c]
    kf = _elu_plus_one(k)                       # [n*s, c]
    # note: v/S and the trailing *S cancel exactly and are dropped.

    # ---- batch-block-diagonal layout so per-batch matmuls fuse ---------------
    q_bd = _block_diag_rows(qf, n, l, c)        # [n*l, n*c]
    k_bd = _block_diag_rows(kf, n, s, c)        # [n*s, n*c]

    # ---- K^T V (per batch) AND K column sums in ONE matmul -------------------
    v_aug = jnp.concatenate(
        [v, jnp.ones((ns, 1), jnp.float32)], axis=1)                  # [n*s, c+1]
    kv_all = lax.dot_general(k_bd, v_aug, (((0,), (0,)), ((), ())),
                             preferred_element_type=jnp.float32)      # [n*c, c+1]
    kv = kv_all[:, 0:c]                         # [n*c, c]  per-batch K^T V stacked
    ksum = kv_all[:, c:c + 1]                   # [n*c, 1]  per-batch K column sums

    # ---- fused numerator / denominator: ONE matmul ---------------------------
    hm_t = jnp.concatenate([hm] * n, axis=0)    # [n*c, c]  head mask per batch block
    r_all = jnp.concatenate([kv * hm_t, hm_t * ksum], axis=1)         # [n*c, 2c]
    nd = jnp.dot(q_bd, r_all, preferred_element_type=jnp.float32)     # [n*l, 2c]
    num = nd[:, 0:c]
    den = nd[:, c:2 * c]
    msg = num * pl.reciprocal(den + ATTN_EPS, approx=False)           # [n*l, c]

    # ---- merge projection + LayerNorm1 ---------------------------------------
    merged = jnp.dot(msg, wm, preferred_element_type=jnp.float32)     # [n*l, c]
    n1 = _layer_norm(merged, g1, b1)

    # ---- MLP on concat([x, message]) + LayerNorm2 -----------------------------
    cat = jnp.concatenate([x, n1], axis=-1)                           # [n*l, 2c]
    h1 = jnp.maximum(
        jnp.dot(cat, w1, preferred_element_type=jnp.float32), 0.0)    # [n*l, 2c]
    h2 = jnp.dot(h1, w2, preferred_element_type=jnp.float32)          # [n*l, c]
    n2 = _layer_norm(h2, g2, b2)

    # ---- residual -------------------------------------------------------------
    o_ref[...] = x + n2


def loftr_encoder_layer(x, source, params):
    n, l, c = x.shape
    s = source.shape[1]

    # --- activation slab: [x ; source] folded over batch ----------------------
    rows = jnp.concatenate(
        [x.reshape(n * l, c), source.reshape(n * s, c)], axis=0)      # [n*(l+s), c]

    # --- packed parameter slab [3c, 4c] (lane-dense, single DMA) --------------
    # rows 0:2c   : [ w1 (2c) | w2 (c) | wm (rows 0:c) / head_mask (rows c:2c) ]
    # rows 2c:3c  : [ wq|wk|wv (3c)    | LN params in rows 2c:2c+4, zeros below ]
    head_mask = ((np.arange(c)[:, None] // HEAD_DIM) ==
                 (np.arange(c)[None, :] // HEAD_DIM)).astype(np.float32)
    col3 = jnp.concatenate([params["wm"], jnp.asarray(head_mask)], axis=0)    # [2c, c]
    top = jnp.concatenate([params["w1"], params["w2"], col3], axis=1)         # [2c, 4c]
    w_qkv = jnp.concatenate([params["wq"], params["wk"], params["wv"]],
                            axis=1)                                            # [c, 3c]
    ln = jnp.concatenate([params["g1"], params["b1"],
                          params["g2"], params["b2"]], axis=0)                 # [4, c]
    ln_pad = jnp.zeros((c, c), jnp.float32).at[:4, :].set(ln)                  # [c, c]
    bot = jnp.concatenate([w_qkv, ln_pad], axis=1)                             # [c, 4c]
    slab = jnp.concatenate([top, bot], axis=0)                                 # [3c, 4c]

    kernel = functools.partial(loftr_kernel, n, l, s)

    out = pl.pallas_call(
        kernel,
        out_shape=jax.ShapeDtypeStruct((n * l, c), jnp.float32),
    )(rows, slab)

    return out.reshape(n, l, c)


# ------------------------- pure-JAX reference -------------------------------
def reference(x, source, p):
    n, l, c = x.shape
    s = source.shape[1]
    h, d = NHEAD, HEAD_DIM
    q = (x @ p["wq"]).reshape(n, l, h, d)
    k = (source @ p["wk"]).reshape(n, s, h, d)
    v = (source @ p["wv"]).reshape(n, s, h, d)
    Q = jax.nn.elu(q) + 1.0
    K = jax.nn.elu(k) + 1.0
    values = v / s
    KV = jnp.einsum("nshd,nshv->nhdv", K, values)
    Z = 1.0 / (jnp.einsum("nlhd,nhd->nlh", Q, K.sum(axis=1)) + ATTN_EPS)
    msg = jnp.einsum("nlhd,nhdv,nlh->nlhv", Q, KV, Z) * s
    msg = msg.reshape(n, l, c) @ p["wm"]

    def ln(y, g, b):
        mu = y.mean(-1, keepdims=True)
        var = ((y - mu) ** 2).mean(-1, keepdims=True)
        return (y - mu) / jnp.sqrt(var + LN_EPS) * g + b

    msg = ln(msg, p["g1"], p["b1"])
    cat = jnp.concatenate([x, msg], axis=-1)
    out = jnp.maximum(cat @ p["w1"], 0.0) @ p["w2"]
    out = ln(out, p["g2"], p["b2"])
    return x + out


if __name__ == "__main__":
    key = jax.random.PRNGKey(0)
    keys = jax.random.split(key, 8)

    x = jax.random.normal(keys[0], (N, L, D_MODEL), dtype=jnp.float32)
    source = jax.random.normal(keys[1], (N, S, D_MODEL), dtype=jnp.float32)

    scale = 0.1
    params = {
        # linear weights stored as [C_in, C_out] (i.e. PyTorch weight transposed)
        "wq": scale * jax.random.normal(keys[2], (D_MODEL, D_MODEL), dtype=jnp.float32),
        "wk": scale * jax.random.normal(keys[3], (D_MODEL, D_MODEL), dtype=jnp.float32),
        "wv": scale * jax.random.normal(keys[4], (D_MODEL, D_MODEL), dtype=jnp.float32),
        "wm": scale * jax.random.normal(keys[5], (D_MODEL, D_MODEL), dtype=jnp.float32),
        "w1": scale * jax.random.normal(keys[6], (2 * D_MODEL, 2 * D_MODEL), dtype=jnp.float32),
        "w2": scale * jax.random.normal(keys[7], (2 * D_MODEL, D_MODEL), dtype=jnp.float32),
        # LayerNorm affine params, kept 2D [1, C] for clean TPU layout
        "g1": jnp.ones((1, D_MODEL), dtype=jnp.float32),
        "b1": jnp.zeros((1, D_MODEL), dtype=jnp.float32),
        "g2": jnp.ones((1, D_MODEL), dtype=jnp.float32),
        "b2": jnp.zeros((1, D_MODEL), dtype=jnp.float32),
    }

    out = loftr_encoder_layer(x, source, params)
    out = jax.block_until_ready(out)

    ref = reference(x, source, params)
    assert out.shape == (N, L, D_MODEL)
    assert jnp.allclose(out, ref, atol=1e-4, rtol=1e-4), \
        f"max abs err {jnp.max(jnp.abs(out - ref))}"
    print("KERNEL_OK")
</pallas_src>

<mosaic_0001>
module attributes {stable_mosaic.version = 11 : i64} {
  func.func @loftr_kernel(%arg0: memref<64x32xf32, #tpu.memory_space<vmem>>, %arg1: memref<96x128xf32, #tpu.memory_space<vmem>>, %arg2: memref<32x32xf32, #tpu.memory_space<vmem>>) attributes {dimension_semantics = [], scalar_prefetch = 0 : i64, scratch_operands = 0 : i64, tpu.core_type = #tpu.core_type<tc>} {
    %c0 = arith.constant 0 : index
    %c0_0 = arith.constant 0 : index
    %0 = vector.load %arg0[%c0, %c0_0] : memref<64x32xf32, #tpu.memory_space<vmem>>, vector<64x32xf32>
    %c0_1 = arith.constant 0 : index
    %c0_2 = arith.constant 0 : index
    %1 = vector.load %arg1[%c0_1, %c0_2] : memref<96x128xf32, #tpu.memory_space<vmem>>, vector<96x128xf32>
    %2 = vector.extract_strided_slice %1 {offsets = [0, 0], sizes = [64, 64], strides = [1, 1]} : vector<96x128xf32> to vector<64x64xf32>
    %3 = vector.extract_strided_slice %1 {offsets = [0, 64], sizes = [64, 32], strides = [1, 1]} : vector<96x128xf32> to vector<64x32xf32>
    %4 = vector.extract_strided_slice %1 {offsets = [0, 96], sizes = [32, 32], strides = [1, 1]} : vector<96x128xf32> to vector<32x32xf32>
    %5 = vector.extract_strided_slice %1 {offsets = [32, 96], sizes = [32, 32], strides = [1, 1]} : vector<96x128xf32> to vector<32x32xf32>
    %6 = vector.extract_strided_slice %1 {offsets = [64, 0], sizes = [32, 96], strides = [1, 1]} : vector<96x128xf32> to vector<32x96xf32>
    %7 = vector.extract_strided_slice %1 {offsets = [64, 96], sizes = [4, 32], strides = [1, 1]} : vector<96x128xf32> to vector<4x32xf32>
    %8 = vector.extract_strided_slice %7 {offsets = [0, 0], sizes = [1, 32], strides = [1, 1]} : vector<4x32xf32> to vector<1x32xf32>
    %9 = vector.extract_strided_slice %7 {offsets = [1, 0], sizes = [1, 32], strides = [1, 1]} : vector<4x32xf32> to vector<1x32xf32>
    %10 = vector.extract_strided_slice %7 {offsets = [2, 0], sizes = [1, 32], strides = [1, 1]} : vector<4x32xf32> to vector<1x32xf32>
    %11 = vector.extract_strided_slice %7 {offsets = [3, 0], sizes = [1, 32], strides = [1, 1]} : vector<4x32xf32> to vector<1x32xf32>
    %12 = vector.extract_strided_slice %0 {offsets = [0, 0], sizes = [32, 32], strides = [1, 1]} : vector<64x32xf32> to vector<32x32xf32>
    %cst = arith.constant dense<0.000000e+00> : vector<64x96xf32>
    %13 = tpu.matmul %0, %6, %cst {dimension_numbers = #tpu.dot_dimension_numbers<[1], [0], [0], [1], [0, 0, 1, 1], [], []>} : vector<64x32xf32>, vector<32x96xf32>, vector<64x96xf32> -> vector<64x96xf32>
    %14 = vector.extract_strided_slice %13 {offsets = [0, 0], sizes = [32, 32], strides = [1, 1]} : vector<64x96xf32> to vector<32x32xf32>
    %15 = vector.extract_strided_slice %13 {offsets = [32, 32], sizes = [32, 32], strides = [1, 1]} : vector<64x96xf32> to vector<32x32xf32>
    %16 = vector.extract_strided_slice %13 {offsets = [32, 64], sizes = [32, 32], strides = [1, 1]} : vector<64x96xf32> to vector<32x32xf32>
    %cst_3 = arith.constant 0.000000e+00 : f32
    %17 = vector.broadcast %cst_3 : f32 to vector<32x32xf32>
    %18 = arith.cmpf ogt, %14, %17 : vector<32x32xf32>
    %cst_4 = arith.constant 1.000000e+00 : f32
    %19 = vector.broadcast %cst_4 : f32 to vector<32x32xf32>
    %20 = arith.addf %14, %19 : vector<32x32xf32>
    %21 = math.exp %14 : vector<32x32xf32>
    %22 = arith.select %18, %20, %21 : vector<32x32xi1>, vector<32x32xf32>
    %cst_5 = arith.constant 0.000000e+00 : f32
    %23 = vector.broadcast %cst_5 : f32 to vector<32x32xf32>
    %24 = arith.cmpf ogt, %15, %23 : vector<32x32xf32>
    %cst_6 = arith.constant 1.000000e+00 : f32
    %25 = vector.broadcast %cst_6 : f32 to vector<32x32xf32>
    %26 = arith.addf %15, %25 : vector<32x32xf32>
    %27 = math.exp %15 : vector<32x32xf32>
    %28 = arith.select %24, %26, %27 : vector<32x32xi1>, vector<32x32xf32>
    %cst_7 = arith.constant 0.000000e+00 : f32
    %29 = vector.broadcast %cst_7 : f32 to vector<16x32xf32>
    %30 = vector.extract_strided_slice %22 {offsets = [0, 0], sizes = [16, 32], strides = [1, 1]} : vector<32x32xf32> to vector<16x32xf32>
    %31 = tpu.concatenate %30, %29 in 1 : vector<16x32xf32>, vector<16x32xf32> -> vector<16x64xf32>
    %32 = vector.extract_strided_slice %22 {offsets = [16, 0], sizes = [16, 32], strides = [1, 1]} : vector<32x32xf32> to vector<16x32xf32>
    %33 = tpu.concatenate %29, %32 in 1 : vector<16x32xf32>, vector<16x32xf32> -> vector<16x64xf32>
    %34 = tpu.concatenate %31, %33 in 0 : vector<16x64xf32>, vector<16x64xf32> -> vector<32x64xf32>
    %cst_8 = arith.constant 0.000000e+00 : f32
    %35 = vector.broadcast %cst_8 : f32 to vector<16x32xf32>
    %36 = vector.extract_strided_slice %28 {offsets = [0, 0], sizes = [16, 32], strides = [1, 1]} : vector<32x32xf32> to vector<16x32xf32>
    %37 = tpu.concatenate %36, %35 in 1 : vector<16x32xf32>, vector<16x32xf32> -> vector<16x64xf32>
    %38 = vector.extract_strided_slice %28 {offsets = [16, 0], sizes = [16, 32], strides = [1, 1]} : vector<32x32xf32> to vector<16x32xf32>
    %39 = tpu.concatenate %35, %38 in 1 : vector<16x32xf32>, vector<16x32xf32> -> vector<16x64xf32>
    %40 = tpu.concatenate %37, %39 in 0 : vector<16x64xf32>, vector<16x64xf32> -> vector<32x64xf32>
    %cst_9 = arith.constant 1.000000e+00 : f32
    %41 = vector.broadcast %cst_9 : f32 to vector<32x1xf32>
    %42 = tpu.concatenate %16, %41 in 1 : vector<32x32xf32>, vector<32x1xf32> -> vector<32x33xf32>
    %cst_10 = arith.constant dense<0.000000e+00> : vector<64x33xf32>
    %43 = tpu.matmul %40, %42, %cst_10 {dimension_numbers = #tpu.dot_dimension_numbers<[0], [0], [1], [1], [0, 1, 1, 1], [], []>} : vector<32x64xf32>, vector<32x33xf32>, vector<64x33xf32> -> vector<64x33xf32>
    %44 = vector.extract_strided_slice %43 {offsets = [0, 0], sizes = [64, 32], strides = [1, 1]} : vector<64x33xf32> to vector<64x32xf32>
    %45 = vector.extract_strided_slice %43 {offsets = [0, 32], sizes = [64, 1], strides = [1, 1]} : vector<64x33xf32> to vector<64x1xf32>
    %46 = tpu.concatenate %5, %5 in 0 : vector<32x32xf32>, vector<32x32xf32> -> vector<64x32xf32>
    %47 = arith.mulf %44, %46 : vector<64x32xf32>
    %48 = vector.broadcast %45 : vector<64x1xf32> to vector<64x32xf32>
    %49 = arith.mulf %46, %48 : vector<64x32xf32>
    %50 = tpu.concatenate %47, %49 in 1 : vector<64x32xf32>, vector<64x32xf32> -> vector<64x64xf32>
    %cst_11 = arith.constant dense<0.000000e+00> : vector<32x64xf32>
    %51 = tpu.matmul %34, %50, %cst_11 {dimension_numbers = #tpu.dot_dimension_numbers<[1], [0], [0], [1], [0, 0, 1, 1], [], []>} : vector<32x64xf32>, vector<64x64xf32>, vector<32x64xf32> -> vector<32x64xf32>
    %52 = vector.extract_strided_slice %51 {offsets = [0, 0], sizes = [32, 32], strides = [1, 1]} : vector<32x64xf32> to vector<32x32xf32>
    %53 = vector.extract_strided_slice %51 {offsets = [0, 32], sizes = [32, 32], strides = [1, 1]} : vector<32x64xf32> to vector<32x32xf32>
    %cst_12 = arith.constant 9.99999997E-7 : f32
    %54 = vector.broadcast %cst_12 : f32 to vector<32x32xf32>
    %55 = arith.addf %53, %54 : vector<32x32xf32>
    %56 = tpu.reciprocal %55 : vector<32x32xf32> -> vector<32x32xf32>
    %57 = arith.mulf %52, %56 : vector<32x32xf32>
    %cst_13 = arith.constant dense<0.000000e+00> : vector<32x32xf32>
    %58 = tpu.matmul %57, %4, %cst_13 {dimension_numbers = #tpu.dot_dimension_numbers<[1], [0], [0], [1], [0, 0, 1, 1], [], []>} : vector<32x32xf32>, vector<32x32xf32>, vector<32x32xf32> -> vector<32x32xf32>
    %cst_14 = arith.constant dense<0.000000e+00> : vector<32xf32>
    %59 = vector.multi_reduction <add>, %58, %cst_14 [1] : vector<32x32xf32> to vector<32xf32>
    %60 = vector.shape_cast %59 : vector<32xf32> to vector<32x1xf32>
    %cst_15 = arith.constant 3.200000e+01 : f32
    %61 = vector.broadcast %cst_15 : f32 to vector<32x1xf32>
    %62 = arith.divf %60, %61 : vector<32x1xf32>
    %63 = vector.broadcast %62 : vector<32x1xf32> to vector<32x32xf32>
    %64 = arith.subf %58, %63 : vector<32x32xf32>
    %65 = arith.mulf %64, %64 : vector<32x32xf32>
    %cst_16 = arith.constant dense<0.000000e+00> : vector<32xf32>
    %66 = vector.multi_reduction <add>, %65, %cst_16 [1] : vector<32x32xf32> to vector<32xf32>
    %67 = vector.shape_cast %66 : vector<32xf32> to vector<32x1xf32>
    %cst_17 = arith.constant 3.200000e+01 : f32
    %68 = vector.broadcast %cst_17 : f32 to vector<32x1xf32>
    %69 = arith.divf %67, %68 : vector<32x1xf32>
    %70 = vector.broadcast %62 : vector<32x1xf32> to vector<32x32xf32>
    %71 = arith.subf %58, %70 : vector<32x32xf32>
    %cst_18 = arith.constant 9.99999974E-6 : f32
    %72 = vector.broadcast %cst_18 : f32 to vector<32x1xf32>
    %73 = arith.addf %69, %72 : vector<32x1xf32>
    %74 = math.rsqrt %73 : vector<32x1xf32>
    %75 = vector.broadcast %74 : vector<32x1xf32> to vector<32x32xf32>
    %76 = arith.mulf %71, %75 : vector<32x32xf32>
    %77 = vector.broadcast %8 : vector<1x32xf32> to vector<32x32xf32>
    %78 = arith.mulf %76, %77 : vector<32x32xf32>
    %79 = vector.broadcast %9 : vector<1x32xf32> to vector<32x32xf32>
    %80 = arith.addf %78, %79 : vector<32x32xf32>
    %81 = tpu.concatenate %12, %80 in 1 : vector<32x32xf32>, vector<32x32xf32> -> vector<32x64xf32>
    %cst_19 = arith.constant dense<0.000000e+00> : vector<32x64xf32>
    %82 = tpu.matmul %81, %2, %cst_19 {dimension_numbers = #tpu.dot_dimension_numbers<[1], [0], [0], [1], [0, 0, 1, 1], [], []>} : vector<32x64xf32>, vector<64x64xf32>, vector<32x64xf32> -> vector<32x64xf32>
    %cst_20 = arith.constant 0.000000e+00 : f32
    %83 = vector.broadcast %cst_20 : f32 to vector<32x64xf32>
    %84 = arith.maximumf %82, %83 : vector<32x64xf32>
    %cst_21 = arith.constant dense<0.000000e+00> : vector<32x32xf32>
    %85 = tpu.matmul %84, %3, %cst_21 {dimension_numbers = #tpu.dot_dimension_numbers<[1], [0], [0], [1], [0, 0, 1, 1], [], []>} : vector<32x64xf32>, vector<64x32xf32>, vector<32x32xf32> -> vector<32x32xf32>
    %cst_22 = arith.constant dense<0.000000e+00> : vector<32xf32>
    %86 = vector.multi_reduction <add>, %85, %cst_22 [1] : vector<32x32xf32> to vector<32xf32>
    %87 = vector.shape_cast %86 : vector<32xf32> to vector<32x1xf32>
    %cst_23 = arith.constant 3.200000e+01 : f32
    %88 = vector.broadcast %cst_23 : f32 to vector<32x1xf32>
    %89 = arith.divf %87, %88 : vector<32x1xf32>
    %90 = vector.broadcast %89 : vector<32x1xf32> to vector<32x32xf32>
    %91 = arith.subf %85, %90 : vector<32x32xf32>
    %92 = arith.mulf %91, %91 : vector<32x32xf32>
    %cst_24 = arith.constant dense<0.000000e+00> : vector<32xf32>
    %93 = vector.multi_reduction <add>, %92, %cst_24 [1] : vector<32x32xf32> to vector<32xf32>
    %94 = vector.shape_cast %93 : vector<32xf32> to vector<32x1xf32>
    %cst_25 = arith.constant 3.200000e+01 : f32
    %95 = vector.broadcast %cst_25 : f32 to vector<32x1xf32>
    %96 = arith.divf %94, %95 : vector<32x1xf32>
    %97 = vector.broadcast %89 : vector<32x1xf32> to vector<32x32xf32>
    %98 = arith.subf %85, %97 : vector<32x32xf32>
    %cst_26 = arith.constant 9.99999974E-6 : f32
    %99 = vector.broadcast %cst_26 : f32 to vector<32x1xf32>
    %100 = arith.addf %96, %99 : vector<32x1xf32>
    %101 = math.rsqrt %100 : vector<32x1xf32>
    %102 = vector.broadcast %101 : vector<32x1xf32> to vector<32x32xf32>
    %103 = arith.mulf %98, %102 : vector<32x32xf32>
    %104 = vector.broadcast %10 : vector<1x32xf32> to vector<32x32xf32>
    %105 = arith.mulf %103, %104 : vector<32x32xf32>
    %106 = vector.broadcast %11 : vector<1x32xf32> to vector<32x32xf32>
    %107 = arith.addf %105, %106 : vector<32x32xf32>
    %108 = arith.addf %12, %107 : vector<32x32xf32>
    %c0_27 = arith.constant 0 : index
    %c0_28 = arith.constant 0 : index
    %109 = vector.load %arg2[%c0_27, %c0_28] : memref<32x32xf32, #tpu.memory_space<vmem>>, vector<32x32xf32>
    tpu.vector_store %arg2[%c0_27, %c0_28], %108 {strides = array<i32>} : memref<32x32xf32, #tpu.memory_space<vmem>>, vector<32x32xf32>,
    return
  }
}

</mosaic_0001>

<llo_original>
// kernel: tpu_custom_call.1
$region0: #{tpu_custom_call.1}
  #allocation0 [shape = 'u32[]', space=smem, size = 0x4, offset = 0x4, fixed_abs, tag = 'smem constant byte address 0x4 - core index']
  #allocation1 [shape = 'u32[144,128]{1,0:T(1,128)}', space=vmem, size = 0x12000, scoped, tag = 'internal scratch']
  %s0 = inlined_call_operand.vmem [shape: f32[64,32], index: 0, kind: input, shape index: {}]
  %s1 = inlined_call_operand.vmem [shape: f32[96,128], index: 1, kind: input, shape index: {}]
  %s2 = inlined_call_operand.hbm [shape: f32[32,32], index: 2, kind: output, shape index: {}]
  %s3 = sld [smem:[#allocation0]]
  $region18: #{tpu_custom_call.1} parent=0
    _
  %s5 = ssub.s32 1, %s3
  %s6 = scalar_select 0, %s5, %s3
  $region1: #{tpu_custom_call.1} parent=0
    #allocation2 [shape = 'u8[16384]{0}', space=vmem, size = 0x4000, scoped, tag = 'output window, operand 0, single buffered']
    #allocation3 [shape = 's32[1]{0}', space=sflag, size = 0x4, scoped, tag = 'scoped memory for tpu_custom_call.1']
    %7 = vsyncpa [#allocation3], 0
    // Predicated region
    $region2: #{tpu_custom_call.1} parent=1 // pred_check
      _
    $region3: #{tpu_custom_call.1} parent=1 // pred_check_branch
      %9 = sbr.rel (0) target = $region5
    $region4: #{tpu_custom_call.1} parent=1 // pred_region
      _
    $region5: #{tpu_custom_call.1} parent=1 // pred_fallthru
      _
    // Predicated region
    $region6: #{tpu_custom_call.1} parent=1 // pred_check
      _
    $region7: #{tpu_custom_call.1} parent=1 // pred_check_branch
      %11 = sbr.rel (0) target = $region9
    $region8: #{tpu_custom_call.1} parent=1 // pred_region
      _
    $region9: #{tpu_custom_call.1} parent=1 // pred_fallthru
      _
    %v12 = vld [vmem:[%s0] sm:$0xff]
    %v13 = vld [vmem:[%s0 + $0x8] sm:$0xff]
    %v14 = vld [vmem:[%s0 + $0x10] sm:$0xff]
    %v15 = vld [vmem:[%s0 + $0x18] sm:$0xff]
    %v16 = vld [vmem:[%s0 + $0x20] sm:$0xff]
    %v17 = vld [vmem:[%s0 + $0x28] sm:$0xff]
    %v18 = vld [vmem:[%s0 + $0x30] sm:$0xff]
    %v19 = vld [vmem:[%s0 + $0x38] sm:$0xff]
    %v20 = vld [vmem:[%s1] sm:$0xff]
    %v21 = vld [vmem:[%s1 + $0x8] sm:$0xff]
    %v22 = vld [vmem:[%s1 + $0x10] sm:$0xff]
    %v23 = vld [vmem:[%s1 + $0x18] sm:$0xff]
    %v24 = vld [vmem:[%s1 + $0x20] sm:$0xff]
    %v25 = vld [vmem:[%s1 + $0x28] sm:$0xff]
    %v26 = vld [vmem:[%s1 + $0x30] sm:$0xff]
    %v27 = vld [vmem:[%s1 + $0x38] sm:$0xff]
    %v28 = vld [vmem:[%s1 + $0x40] sm:$0xff]
    %v29 = vld [vmem:[%s1 + $0x48] sm:$0xff]
    %v30 = vld [vmem:[%s1 + $0x50] sm:$0xff]
    %v31 = vld [vmem:[%s1 + $0x58] sm:$0xff]
    %vm32 = vcmask 261120
    %v34 = vsel %vm32, %v12, 0
    %v37 = vsel %vm32, %v13, 0
    %v40 = vsel %vm32, %v14, 0
    %v43 = vsel %vm32, %v15, 0
    %v46 = vsel %vm32, %v16, 0
    %v49 = vsel %vm32, %v17, 0
    %v52 = vsel %vm32, %v18, 0
    %v55 = vsel %vm32, %v19, 0
    %57 = vmatprep.subr.mxu0 0.0
    %58 = vmatpush1.msra.mxu0 %v28
    %59 = vmatprep.subr.mxu0 0.0
    %60 = vmatpush1.msra.mxu0 %v29
    %61 = vmatprep.subr.mxu0 0.0
    %62 = vmatpush1.msra.mxu0 %v30
    %63 = vmatprep.subr.mxu0 0.0
    %64 = vmatpush1.msra.mxu0 %v31
    %65 = vmatprep.subr.mxu0 0.0
    %66 = vmatpush1.msra.mxu0 0.0
    %67 = vmatprep.subr.mxu0 0.0
    %68 = vmatpush1.msra.mxu0 0.0
    %69 = vmatprep.subr.mxu0 0.0
    %70 = vmatpush1.msra.mxu0 0.0
    %71 = vmatprep.subr.mxu0 0.0
    %72 = vmatpush1.msra.mxu0 0.0
    %73 = vmatprep.subr.mxu0 0.0
    %74 = vmatpush1.msra.mxu0 0.0
    %75 = vmatprep.subr.mxu0 0.0
    %76 = vmatpush1.msra.mxu0 0.0
    %77 = vmatprep.subr.mxu0 0.0
    %78 = vmatpush1.msra.mxu0 0.0
    %79 = vmatprep.subr.mxu0 0.0
    %80 = vmatpush1.msra.mxu0 0.0
    %81 = vmatprep.subr.mxu0 0.0
    %82 = vmatpush1.msra.mxu0 0.0
    %83 = vmatprep.subr.mxu0 0.0
    %84 = vmatpush1.msra.mxu0 0.0
    %85 = vmatprep.subr.mxu0 0.0
    %86 = vmatpush1.msra.mxu0 0.0
    %87 = vmatprep.subr.mxu0 0.0
    %88 = vmatpush1.msra.mxu0 0.0
    %89 = vmatprep.subr.mxu0 0.0
    %90 = vmatpush1.msra.mxu0 0.0
    %91 = vmatprep.subr.mxu0 0.0
    %92 = vmatpush1.msra.mxu0 0.0
    %93 = vmatprep.subr.mxu0 0.0
    %94 = vmatpush1.msra.mxu0 0.0
    %95 = vmatprep.subr.mxu0 0.0
    %96 = vmatpush1.msra.mxu0 0.0
    %97 = vmatprep.subr.mxu0 0.0
    %98 = vmatpush1.msra.mxu0 0.0
    %99 = vmatprep.subr.mxu0 0.0
    %100 = vmatpush1.msra.mxu0 0.0
    %101 = vmatprep.subr.mxu0 0.0
    %102 = vmatpush1.msra.mxu0 0.0
    %103 = vmatprep.subr.mxu0 0.0
    %104 = vmatpush1.msra.mxu0 0.0
    %105 = vmatprep.subr.mxu0 0.0
    %106 = vmatpush1.msra.mxu0 0.0
    %107 = vmatprep.subr.mxu0 0.0
    %108 = vmatpush1.msra.mxu0 0.0
    %109 = vmatprep.subr.mxu0 0.0
    %110 = vmatpush1.msra.mxu0 0.0
    %111 = vmatprep.subr.mxu0 0.0
    %112 = vmatpush1.msra.mxu0 0.0
    %113 = vmatprep.subr.mxu0 0.0
    %114 = vmatpush1.msra.mxu0 0.0
    %115 = vmatprep.subr.mxu0 0.0
    %116 = vmatpush1.msra.mxu0 0.0
    %117 = vmatprep.subr.mxu0 0.0
    %118 = vmatpush1.msra.mxu0 0.0
    %119 = vmatprep.subr.mxu0 0.0
    %120 = vmatpush1.msra.mxu0 0.0
    %121 = vmatprep.mubr.f32.mxu0 0.0
    %122 = vmatmul.mubr.f32.gmra.mrb[0].mxu0 %v34
    %v123 = vpop.f32.mrb[0].mxu0
    %v124 = vadd.f32 0.0, %v123
    %v125 = vpop.f32.mrb[0].mxu0
    %126 = vmatprep.mubr.f32.mxu0 0.0
    %127 = vmatmul.mubr.f32.gmra.mrb[0].mxu0 %v37
    %v128 = vpop.f32.mrb[0].mxu0
    %v129 = vadd.f32 0.0, %v128
    %v130 = vpop.f32.mrb[0].mxu0
    %131 = vmatprep.mubr.f32.mxu0 0.0
    %132 = vmatmul.mubr.f32.gmra.mrb[0].mxu0 %v40
    %v133 = vpop.f32.mrb[0].mxu0
    %v134 = vadd.f32 0.0, %v133
    %v135 = vpop.f32.mrb[0].mxu0
    %136 = vmatprep.mubr.f32.mxu0 0.0
    %137 = vmatmul.mubr.f32.gmra.mrb[0].mxu0 %v43
    %v138 = vpop.f32.mrb[0].mxu0
    %v139 = vadd.f32 0.0, %v138
    %v140 = vpop.f32.mrb[0].mxu0
    %141 = vmatprep.mubr.f32.mxu0 0.0
    %142 = vmatmul.mubr.f32.gmra.mrb[0].mxu0 %v46
    %v143 = vpop.f32.mrb[0].mxu0
    %v144 = vadd.f32 0.0, %v143
    %v145 = vpop.f32.mrb[0].mxu0
    %146 = vmatprep.mubr.f32.mxu0 0.0
    %147 = vmatmul.mubr.f32.gmra.mrb[0].mxu0 %v49
    %v148 = vpop.f32.mrb[0].mxu0
    %v149 = vadd.f32 0.0, %v148
    %v150 = vpop.f32.mrb[0].mxu0
    %151 = vmatprep.mubr.f32.mxu0 0.0
    %152 = vmatmul.mubr.f32.gmra.mrb[0].mxu0 %v52
    %v153 = vpop.f32.mrb[0].mxu0
    %v154 = vadd.f32 0.0, %v153
    %v155 = vpop.f32.mrb[0].mxu0
    %156 = vmatprep.mubr.f32.mxu0 0.0
    %157 = vmatmul.mubr.f32.gmra.mrb[0].mxu0 %v55
    %v158 = vpop.f32.mrb[0].mxu0
    %v159 = vadd.f32 0.0, %v158
    %v160 = vpop.f32.mrb[0].mxu0
    %161 = vdwg.mxu0
    %vm162 = vcmp.gt.f32.partialorder %v124, 0.0
    %vm163 = vcmp.gt.f32.partialorder %v129, 0.0
    %vm164 = vcmp.gt.f32.partialorder %v134, 0.0
    %vm165 = vcmp.gt.f32.partialorder %v139, 0.0
    %v166 = vadd.f32 %v124, 1.0
    %v167 = vadd.f32 %v129, 1.0
    %v168 = vadd.f32 %v134, 1.0
    %v169 = vadd.f32 %v139, 1.0
    %v170 = vmul.f32 %v124, 1.442695
    %v171 = vpow.pop %v170
    %v172 = vmul.f32 %v129, 1.442695
    %v173 = vpow.pop %v172
    %v174 = vmul.f32 %v134, 1.442695
    %v175 = vpow.pop %v174
    %v176 = vmul.f32 %v139, 1.442695
    %v177 = vpow.pop %v176
    %v178 = vsel %vm162, %v166, %v171
    %v179 = vsel %vm163, %v167, %v173
    %v180 = vsel %vm164, %v168, %v175
    %v181 = vsel %vm165, %v169, %v177
    %vm182 = vcmp.gt.f32.partialorder %v144, 0.0
    %vm183 = vcmp.gt.f32.partialorder %v149, 0.0
    %vm184 = vcmp.gt.f32.partialorder %v154, 0.0
    %vm185 = vcmp.gt.f32.partialorder %v159, 0.0
    %v186 = vadd.f32 %v144, 1.0
    %v187 = vadd.f32 %v149, 1.0
    %v188 = vadd.f32 %v154, 1.0
    %v189 = vadd.f32 %v159, 1.0
    %v190 = vmul.f32 %v144, 1.442695
    %v191 = vpow.pop %v190
    %v192 = vmul.f32 %v149, 1.442695
    %v193 = vpow.pop %v192
    %v194 = vmul.f32 %v154, 1.442695
    %v195 = vpow.pop %v194
    %v196 = vmul.f32 %v159, 1.442695
    %v197 = vpow.pop %v196
    %v198 = vsel %vm182, %v186, %v191
    %v199 = vsel %vm183, %v187, %v193
    %v200 = vsel %vm184, %v188, %v195
    %v201 = vsel %vm185, %v189, %v197
    %v202 = vsel %vm32, %v178, 0.0
    %v203 = vsel %vm32, %v179, 0.0
    %206 = vrot.lane.b32.xlu0 %v180, 32
    %v207 = vpop.permute.xlu0 %206
    %208 = vrot.lane.b32.xlu0 %v181, 32
    %v209 = vpop.permute.xlu0 %208
    %v212 = vsel %vm32, 0.0, %v207
    %v213 = vsel %vm32, 0.0, %v209
    %216 = vrot.lane.b32.xlu0 %v198, 96
    %v217 = vpop.permute.xlu0 %216
    %218 = vrot.lane.b32.xlu0 %v199, 96
    %v219 = vpop.permute.xlu0 %218
    %v222 = vsel %vm32, %v217, 0.0
    %v223 = vsel %vm32, %v219, 0.0
    %v224 = vsel %vm32, 0.0, %v200
    %v225 = vsel %vm32, 0.0, %v201
    %230 = vrot.lane.b32.xlu0 %v144, 64
    %v231 = vpop.permute.xlu0 %230
    %232 = vrot.lane.b32.xlu0 %v149, 64
    %v233 = vpop.permute.xlu0 %232
    %234 = vrot.lane.b32.xlu0 %v154, 64
    %v235 = vpop.permute.xlu0 %234
    %236 = vrot.lane.b32.xlu0 %v159, 64
    %v237 = vpop.permute.xlu0 %236
    %v242 = vsel %vm32, %v231, 1.0
    %v243 = vsel %vm32, %v233, 1.0
    %v244 = vsel %vm32, %v235, 1.0
    %v245 = vsel %vm32, %v237, 1.0
    %246 = vxpose.xlu0.b32.start [1/16] %v222, 128
    %247 = vxpose.xlu0.b32.cont [2/16] %v223, 128
    %248 = vxpose.xlu0.b32.cont [3/16] %v224, 128
    %249 = vxpose.xlu0.b32.cont [4/16] %v225, 128
    %250 = vxpose.xlu0.b32.cont [5/16] 0.0, 128
    %251 = vxpose.xlu0.b32.cont [6/16] 0.0, 128
    %252 = vxpose.xlu0.b32.cont [7/16] 0.0, 128
    %253 = vxpose.xlu0.b32.cont [8/16] 0.0, 128
    %254 = vxpose.xlu0.b32.cont [9/16] 0.0, 128
    %255 = vxpose.xlu0.b32.cont [10/16] 0.0, 128
    %256 = vxpose.xlu0.b32.cont [11/16] 0.0, 128
    %257 = vxpose.xlu0.b32.cont [12/16] 0.0, 128
    %258 = vxpose.xlu0.b32.cont [13/16] 0.0, 128
    %259 = vxpose.xlu0.b32.cont [14/16] 0.0, 128
    %260 = vxpose.xlu0.b32.cont [15/16] 0.0, 128
    %261 = vxpose.xlu0.b32.end [16/16] 0.0, 128
    %v262 = vpop.trf.xlu0
    %v263 = vpop.trf.xlu0
    %v264 = vpop.trf.xlu0
    %v265 = vpop.trf.xlu0
    %v266 = vpop.trf.xlu0
    %v267 = vpop.trf.xlu0
    %v268 = vpop.trf.xlu0
    %v269 = vpop.trf.xlu0
    %v270 = vpop.trf.xlu0
    %v271 = vpop.trf.xlu0
    %v272 = vpop.trf.xlu0
    %v273 = vpop.trf.xlu0
    %v274 = vpop.trf.xlu0
    %v275 = vpop.trf.xlu0
    %v276 = vpop.trf.xlu0
    %v277 = vpop.trf.xlu0
    %v279 = vsel %vm32, %v262, 0
    %v282 = vsel %vm32, %v263, 0
    %v285 = vsel %vm32, %v264, 0
    %v288 = vsel %vm32, %v265, 0
    %v291 = vsel %vm32, %v266, 0
    %v294 = vsel %vm32, %v267, 0
    %v297 = vsel %vm32, %v268, 0
    %v300 = vsel %vm32, %v269, 0
    %302 = vmatprep.subr.mxu0 0.0
    %303 = vmatpush1.msra.mxu0 %v242
    %304 = vmatprep.subr.mxu0 0.0
    %305 = vmatpush1.msra.mxu0 %v243
    %306 = vmatprep.subr.mxu0 0.0
    %307 = vmatpush1.msra.mxu0 %v244
    %308 = vmatprep.subr.mxu0 0.0
    %309 = vmatpush1.msra.mxu0 %v245
    %310 = vmatprep.subr.mxu0 0.0
    %311 = vmatpush1.msra.mxu0 0.0
    %312 = vmatprep.subr.mxu0 0.0
    %313 = vmatpush1.msra.mxu0 0.0
    %314 = vmatprep.subr.mxu0 0.0
    %315 = vmatpush1.msra.mxu0 0.0
    %316 = vmatprep.subr.mxu0 0.0
    %317 = vmatpush1.msra.mxu0 0.0
    %318 = vmatprep.subr.mxu0 0.0
    %319 = vmatpush1.msra.mxu0 0.0
    %320 = vmatprep.subr.mxu0 0.0
    %321 = vmatpush1.msra.mxu0 0.0
    %322 = vmatprep.subr.mxu0 0.0
    %323 = vmatpush1.msra.mxu0 0.0
    %324 = vmatprep.subr.mxu0 0.0
    %325 = vmatpush1.msra.mxu0 0.0
    %326 = vmatprep.subr.mxu0 0.0
    %327 = vmatpush1.msra.mxu0 0.0
    %328 = vmatprep.subr.mxu0 0.0
    %329 = vmatpush1.msra.mxu0 0.0
    %330 = vmatprep.subr.mxu0 0.0
    %331 = vmatpush1.msra.mxu0 0.0
    %332 = vmatprep.subr.mxu0 0.0
    %333 = vmatpush1.msra.mxu0 0.0
    %334 = vmatprep.subr.mxu0 0.0
    %335 = vmatpush1.msra.mxu0 0.0
    %336 = vmatprep.subr.mxu0 0.0
    %337 = vmatpush1.msra.mxu0 0.0
    %338 = vmatprep.subr.mxu0 0.0
    %339 = vmatpush1.msra.mxu0 0.0
    %340 = vmatprep.subr.mxu0 0.0
    %341 = vmatpush1.msra.mxu0 0.0
    %342 = vmatprep.subr.mxu0 0.0
    %343 = vmatpush1.msra.mxu0 0.0
    %344 = vmatprep.subr.mxu0 0.0
    %345 = vmatpush1.msra.mxu0 0.0
    %346 = vmatprep.subr.mxu0 0.0
    %347 = vmatpush1.msra.mxu0 0.0
    %348 = vmatprep.subr.mxu0 0.0
    %349 = vmatpush1.msra.mxu0 0.0
    %350 = vmatprep.subr.mxu0 0.0
    %351 = vmatpush1.msra.mxu0 0.0
    %352 = vmatprep.subr.mxu0 0.0
    %353 = vmatpush1.msra.mxu0 0.0
    %354 = vmatprep.subr.mxu0 0.0
    %355 = vmatpush1.msra.mxu0 0.0
    %356 = vmatprep.subr.mxu0 0.0
    %357 = vmatpush1.msra.mxu0 0.0
    %358 = vmatprep.subr.mxu0 0.0
    %359 = vmatpush1.msra.mxu0 0.0
    %360 = vmatprep.subr.mxu0 0.0
    %361 = vmatpush1.msra.mxu0 0.0
    %362 = vmatprep.subr.mxu0 0.0
    %363 = vmatpush1.msra.mxu0 0.0
    %364 = vmatprep.subr.mxu0 0.0
    %365 = vmatpush1.msra.mxu0 0.0
    %366 = vmatprep.mubr.f32.mxu0 0.0
    %367 = vmatmul.mubr.f32.gmra.mrb[0].mxu0 %v279
    %v368 = vpop.f32.mrb[0].mxu0
    %v369 = vadd.f32 0.0, %v368
    %v370 = vpop.f32.mrb[0].mxu0
    %371 = vmatprep.mubr.f32.mxu0 0.0
    %372 = vmatmul.mubr.f32.gmra.mrb[0].mxu0 %v282
    %v373 = vpop.f32.mrb[0].mxu0
    %v374 = vadd.f32 0.0, %v373
    %v375 = vpop.f32.mrb[0].mxu0
    %376 = vmatprep.mubr.f32.mxu0 0.0
    %377 = vmatmul.mubr.f32.gmra.mrb[0].mxu0 %v285
    %v378 = vpop.f32.mrb[0].mxu0
    %v379 = vadd.f32 0.0, %v378
    %v380 = vpop.f32.mrb[0].mxu0
    %381 = vmatprep.mubr.f32.mxu0 0.0
    %382 = vmatmul.mubr.f32.gmra.mrb[0].mxu0 %v288
    %v383 = vpop.f32.mrb[0].mxu0
    %v384 = vadd.f32 0.0, %v383
    %v385 = vpop.f32.mrb[0].mxu0
    %386 = vmatprep.mubr.f32.mxu0 0.0
    %387 = vmatmul.mubr.f32.gmra.mrb[0].mxu0 %v291
    %v388 = vpop.f32.mrb[0].mxu0
    %v389 = vadd.f32 0.0, %v388
    %v390 = vpop.f32.mrb[0].mxu0
    %391 = vmatprep.mubr.f32.mxu0 0.0
    %392 = vmatmul.mubr.f32.gmra.mrb[0].mxu0 %v294
    %v393 = vpop.f32.mrb[0].mxu0
    %v394 = vadd.f32 0.0, %v393
    %v395 = vpop.f32.mrb[0].mxu0
    %396 = vmatprep.mubr.f32.mxu0 0.0
    %397 = vmatmul.mubr.f32.gmra.mrb[0].mxu0 %v297
    %v398 = vpop.f32.mrb[0].mxu0
    %v399 = vadd.f32 0.0, %v398
    %v400 = vpop.f32.mrb[0].mxu0
    %401 = vmatprep.mubr.f32.mxu0 0.0
    %402 = vmatmul.mubr.f32.gmra.mrb[0].mxu0 %v300
    %v403 = vpop.f32.mrb[0].mxu0
    %v404 = vadd.f32 0.0, %v403
    %v405 = vpop.f32.mrb[0].mxu0
    %406 = vdwg.mxu0
    %411 = vrot.lane.b32.xlu0 %v24, 32
    %v412 = vpop.permute.xlu0 %411
    %413 = vrot.lane.b32.xlu0 %v25, 32
    %v414 = vpop.permute.xlu0 %413
    %415 = vrot.lane.b32.xlu0 %v26, 32
    %v416 = vpop.permute.xlu0 %415
    %417 = vrot.lane.b32.xlu0 %v27, 32
    %v418 = vpop.permute.xlu0 %417
    %v423 = vmul.f32 %v369, %v412
    %v424 = vmul.f32 %v374, %v414
    %v425 = vmul.f32 %v379, %v416
    %v426 = vmul.f32 %v384, %v418
    %v427 = vmul.f32 %v389, %v412
    %v428 = vmul.f32 %v394, %v414
    %v429 = vmul.f32 %v399, %v416
    %v430 = vmul.f32 %v404, %v418
    %432 = vset.pattern.permute.xlu0 32
    %433 = vperm.xlu0 %432, %v369
    %v434 = vpop.permute.xlu0 %433
    %437 = vset.pattern.permute.xlu0 32
    %438 = vperm.xlu0 %437, %v374
    %v439 = vpop.permute.xlu0 %438
    %442 = vset.pattern.permute.xlu0 32
    %443 = vperm.xlu0 %442, %v379
    %v444 = vpop.permute.xlu0 %443
    %447 = vset.pattern.permute.xlu0 32
    %448 = vperm.xlu0 %447, %v384
    %v449 = vpop.permute.xlu0 %448
    %452 = vset.pattern.permute.xlu0 32
    %453 = vperm.xlu0 %452, %v389
    %v454 = vpop.permute.xlu0 %453
    %457 = vset.pattern.permute.xlu0 32
    %458 = vperm.xlu0 %457, %v394
    %v459 = vpop.permute.xlu0 %458
    %462 = vset.pattern.permute.xlu0 32
    %463 = vperm.xlu0 %462, %v399
    %v464 = vpop.permute.xlu0 %463
    %467 = vset.pattern.permute.xlu0 32
    %468 = vperm.xlu0 %467, %v404
    %v469 = vpop.permute.xlu0 %468
    %v471 = vmul.f32 %v24, %v434
    %v472 = vmul.f32 %v25, %v439
    %v473 = vmul.f32 %v26, %v444
    %v474 = vmul.f32 %v27, %v449
    %v475 = vmul.f32 %v24, %v454
    %v476 = vmul.f32 %v25, %v459
    %v477 = vmul.f32 %v26, %v464
    %v478 = vmul.f32 %v27, %v469
    %487 = vrot.lane.b32.xlu0 %v471, 64
    %v488 = vpop.permute.xlu0 %487
    %489 = vrot.lane.b32.xlu0 %v472, 64
    %v490 = vpop.permute.xlu0 %489
    %491 = vrot.lane.b32.xlu0 %v473, 64
    %v492 = vpop.permute.xlu0 %491
    %493 = vrot.lane.b32.xlu0 %v474, 64
    %v494 = vpop.permute.xlu0 %493
    %495 = vrot.lane.b32.xlu0 %v475, 64
    %v496 = vpop.permute.xlu0 %495
    %497 = vrot.lane.b32.xlu0 %v476, 64
    %v498 = vpop.permute.xlu0 %497
    %499 = vrot.lane.b32.xlu0 %v477, 64
    %v500 = vpop.permute.xlu0 %499
    %501 = vrot.lane.b32.xlu0 %v478, 64
    %v502 = vpop.permute.xlu0 %501
    %v511 = vsel %vm32, %v423, %v488
    %v512 = vsel %vm32, %v424, %v490
    %v513 = vsel %vm32, %v425, %v492
    %v514 = vsel %vm32, %v426, %v494
    %v515 = vsel %vm32, %v427, %v496
    %v516 = vsel %vm32, %v428, %v498
    %v517 = vsel %vm32, %v429, %v500
    %v518 = vsel %vm32, %v430, %v502
    %vm519 = vcmask 523264
    %v521 = vsel %vm519, %v202, 0
    %v524 = vsel %vm519, %v203, 0
    %v527 = vsel %vm519, %v212, 0
    %v530 = vsel %vm519, %v213, 0
    %532 = vmatprep.subr.mxu0 0.0
    %533 = vmatpush1.msra.mxu0 %v511
    %534 = vmatprep.subr.mxu0 0.0
    %535 = vmatpush1.msra.mxu0 %v512
    %536 = vmatprep.subr.mxu0 0.0
    %537 = vmatpush1.msra.mxu0 %v513
    %538 = vmatprep.subr.mxu0 0.0
    %539 = vmatpush1.msra.mxu0 %v514
    %540 = vmatprep.subr.mxu0 0.0
    %541 = vmatpush1.msra.mxu0 %v515
    %542 = vmatprep.subr.mxu0 0.0
    %543 = vmatpush1.msra.mxu0 %v516
    %544 = vmatprep.subr.mxu0 0.0
    %545 = vmatpush1.msra.mxu0 %v517
    %546 = vmatprep.subr.mxu0 0.0
    %547 = vmatpush1.msra.mxu0 %v518
    %548 = vmatprep.subr.mxu0 0.0
    %549 = vmatpush1.msra.mxu0 0.0
    %550 = vmatprep.subr.mxu0 0.0
    %551 = vmatpush1.msra.mxu0 0.0
    %552 = vmatprep.subr.mxu0 0.0
    %553 = vmatpush1.msra.mxu0 0.0
    %554 = vmatprep.subr.mxu0 0.0
    %555 = vmatpush1.msra.mxu0 0.0
    %556 = vmatprep.subr.mxu0 0.0
    %557 = vmatpush1.msra.mxu0 0.0
    %558 = vmatprep.subr.mxu0 0.0
    %559 = vmatpush1.msra.mxu0 0.0
    %560 = vmatprep.subr.mxu0 0.0
    %561 = vmatpush1.msra.mxu0 0.0
    %562 = vmatprep.subr.mxu0 0.0
    %563 = vmatpush1.msra.mxu0 0.0
    %564 = vmatprep.subr.mxu0 0.0
    %565 = vmatpush1.msra.mxu0 0.0
    %566 = vmatprep.subr.mxu0 0.0
    %567 = vmatpush1.msra.mxu0 0.0
    %568 = vmatprep.subr.mxu0 0.0
    %569 = vmatpush1.msra.mxu0 0.0
    %570 = vmatprep.subr.mxu0 0.0
    %571 = vmatpush1.msra.mxu0 0.0
    %572 = vmatprep.subr.mxu0 0.0
    %573 = vmatpush1.msra.mxu0 0.0
    %574 = vmatprep.subr.mxu0 0.0
    %575 = vmatpush1.msra.mxu0 0.0
    %576 = vmatprep.subr.mxu0 0.0
    %577 = vmatpush1.msra.mxu0 0.0
    %578 = vmatprep.subr.mxu0 0.0
    %579 = vmatpush1.msra.mxu0 0.0
    %580 = vmatprep.subr.mxu0 0.0
    %581 = vmatpush1.msra.mxu0 0.0
    %582 = vmatprep.subr.mxu0 0.0
    %583 = vmatpush1.msra.mxu0 0.0
    %584 = vmatprep.subr.mxu0 0.0
    %585 = vmatpush1.msra.mxu0 0.0
    %586 = vmatprep.subr.mxu0 0.0
    %587 = vmatpush1.msra.mxu0 0.0
    %588 = vmatprep.subr.mxu0 0.0
    %589 = vmatpush1.msra.mxu0 0.0
    %590 = vmatprep.subr.mxu0 0.0
    %591 = vmatpush1.msra.mxu0 0.0
    %592 = vmatprep.subr.mxu0 0.0
    %593 = vmatpush1.msra.mxu0 0.0
    %594 = vmatprep.subr.mxu0 0.0
    %595 = vmatpush1.msra.mxu0 0.0
    %596 = vmatprep.mubr.f32.mxu0 0.0
    %597 = vmatmul.mubr.f32.gmra.mrb[0].mxu0 %v521
    %v598 = vpop.f32.mrb[0].mxu0
    %v599 = vadd.f32 0.0, %v598
    %v600 = vpop.f32.mrb[0].mxu0
    %601 = vmatprep.mubr.f32.mxu0 0.0
    %602 = vmatmul.mubr.f32.gmra.mrb[0].mxu0 %v524
    %v603 = vpop.f32.mrb[0].mxu0
    %v604 = vadd.f32 0.0, %v603
    %v605 = vpop.f32.mrb[0].mxu0
    %606 = vmatprep.mubr.f32.mxu0 0.0
    %607 = vmatmul.mubr.f32.gmra.mrb[0].mxu0 %v527
    %v608 = vpop.f32.mrb[0].mxu0
    %v609 = vadd.f32 0.0, %v608
    %v610 = vpop.f32.mrb[0].mxu0
    %611 = vmatprep.mubr.f32.mxu0 0.0
    %612 = vmatmul.mubr.f32.gmra.mrb[0].mxu0 %v530
    %v613 = vpop.f32.mrb[0].mxu0
    %v614 = vadd.f32 0.0, %v613
    %v615 = vpop.f32.mrb[0].mxu0
    %616 = vdwg.mxu0
    %v617 = vadd.f32 %v599, 1e-06
    %v618 = vadd.f32 %v604, 1e-06
    %v619 = vadd.f32 %v609, 1e-06
    %v620 = vadd.f32 %v614, 1e-06
    %v621 = vrcp.pop %v617
    %v622 = vrcp.pop %v618
    %v623 = vrcp.pop %v619
    %v624 = vrcp.pop %v620
    %629 = vrot.lane.b32.xlu0 %v621, 96
    %v630 = vpop.permute.xlu0 %629
    %631 = vrot.lane.b32.xlu0 %v622, 96
    %v632 = vpop.permute.xlu0 %631
    %633 = vrot.lane.b32.xlu0 %v623, 96
    %v634 = vpop.permute.xlu0 %633
    %635 = vrot.lane.b32.xlu0 %v624, 96
    %v636 = vpop.permute.xlu0 %635
    %v641 = vmul.f32 %v599, %v630
    %v642 = vmul.f32 %v604, %v632
    %v643 = vmul.f32 %v609, %v634
    %v644 = vmul.f32 %v614, %v636
    %649 = vrot.lane.b32.xlu0 %v20, 32
    %v650 = vpop.permute.xlu0 %649
    %651 = vrot.lane.b32.xlu0 %v21, 32
    %v652 = vpop.permute.xlu0 %651
    %653 = vrot.lane.b32.xlu0 %v22, 32
    %v654 = vpop.permute.xlu0 %653
    %655 = vrot.lane.b32.xlu0 %v23, 32
    %v656 = vpop.permute.xlu0 %655
    %v662 = vsel %vm32, %v641, 0
    %v665 = vsel %vm32, %v642, 0
    %v668 = vsel %vm32, %v643, 0
    %v671 = vsel %vm32, %v644, 0
    %673 = vmatprep.subr.mxu0 0.0
    %674 = vmatpush1.msra.mxu0 %v650
    %675 = vmatprep.subr.mxu0 0.0
    %676 = vmatpush1.msra.mxu0 %v652
    %677 = vmatprep.subr.mxu0 0.0
    %678 = vmatpush1.msra.mxu0 %v654
    %679 = vmatprep.subr.mxu0 0.0
    %680 = vmatpush1.msra.mxu0 %v656
    %681 = vmatprep.subr.mxu0 0.0
    %682 = vmatpush1.msra.mxu0 0.0
    %683 = vmatprep.subr.mxu0 0.0
    %684 = vmatpush1.msra.mxu0 0.0
    %685 = vmatprep.subr.mxu0 0.0
    %686 = vmatpush1.msra.mxu0 0.0
    %687 = vmatprep.subr.mxu0 0.0
    %688 = vmatpush1.msra.mxu0 0.0
    %689 = vmatprep.subr.mxu0 0.0
    %690 = vmatpush1.msra.mxu0 0.0
    %691 = vmatprep.subr.mxu0 0.0
    %692 = vmatpush1.msra.mxu0 0.0
    %693 = vmatprep.subr.mxu0 0.0
    %694 = vmatpush1.msra.mxu0 0.0
    %695 = vmatprep.subr.mxu0 0.0
    %696 = vmatpush1.msra.mxu0 0.0
    %697 = vmatprep.subr.mxu0 0.0
    %698 = vmatpush1.msra.mxu0 0.0
    %699 = vmatprep.subr.mxu0 0.0
    %700 = vmatpush1.msra.mxu0 0.0
    %701 = vmatprep.subr.mxu0 0.0
    %702 = vmatpush1.msra.mxu0 0.0
    %703 = vmatprep.subr.mxu0 0.0
    %704 = vmatpush1.msra.mxu0 0.0
    %705 = vmatprep.subr.mxu0 0.0
    %706 = vmatpush1.msra.mxu0 0.0
    %707 = vmatprep.subr.mxu0 0.0
    %708 = vmatpush1.msra.mxu0 0.0
    %709 = vmatprep.subr.mxu0 0.0
    %710 = vmatpush1.msra.mxu0 0.0
    %711 = vmatprep.subr.mxu0 0.0
    %712 = vmatpush1.msra.mxu0 0.0
    %713 = vmatprep.subr.mxu0 0.0
    %714 = vmatpush1.msra.mxu0 0.0
    %715 = vmatprep.subr.mxu0 0.0
    %716 = vmatpush1.msra.mxu0 0.0
    %717 = vmatprep.subr.mxu0 0.0
    %718 = vmatpush1.msra.mxu0 0.0
    %719 = vmatprep.subr.mxu0 0.0
    %720 = vmatpush1.msra.mxu0 0.0
    %721 = vmatprep.subr.mxu0 0.0
    %722 = vmatpush1.msra.mxu0 0.0
    %723 = vmatprep.subr.mxu0 0.0
    %724 = vmatpush1.msra.mxu0 0.0
    %725 = vmatprep.subr.mxu0 0.0
    %726 = vmatpush1.msra.mxu0 0.0
    %727 = vmatprep.subr.mxu0 0.0
    %728 = vmatpush1.msra.mxu0 0.0
    %729 = vmatprep.subr.mxu0 0.0
    %730 = vmatpush1.msra.mxu0 0.0
    %731 = vmatprep.subr.mxu0 0.0
    %732 = vmatpush1.msra.mxu0 0.0
    %733 = vmatprep.subr.mxu0 0.0
    %734 = vmatpush1.msra.mxu0 0.0
    %735 = vmatprep.subr.mxu0 0.0
    %736 = vmatpush1.msra.mxu0 0.0
    %737 = vmatprep.mubr.f32.mxu0 0.0
    %738 = vmatmul.mubr.f32.gmra.mrb[0].mxu0 %v662
    %v739 = vpop.f32.mrb[0].mxu0
    %v740 = vadd.f32 0.0, %v739
    %v741 = vpop.f32.mrb[0].mxu0
    %742 = vmatprep.mubr.f32.mxu0 0.0
    %743 = vmatmul.mubr.f32.gmra.mrb[0].mxu0 %v665
    %v744 = vpop.f32.mrb[0].mxu0
    %v745 = vadd.f32 0.0, %v744
    %v746 = vpop.f32.mrb[0].mxu0
    %747 = vmatprep.mubr.f32.mxu0 0.0
    %748 = vmatmul.mubr.f32.gmra.mrb[0].mxu0 %v668
    %v749 = vpop.f32.mrb[0].mxu0
    %v750 = vadd.f32 0.0, %v749
    %v751 = vpop.f32.mrb[0].mxu0
    %752 = vmatprep.mubr.f32.mxu0 0.0
    %753 = vmatmul.mubr.f32.gmra.mrb[0].mxu0 %v671
    %v754 = vpop.f32.mrb[0].mxu0
    %v755 = vadd.f32 0.0, %v754
    %v756 = vpop.f32.mrb[0].mxu0
    %757 = vdwg.mxu0
    %v758 = vsel %vm32, %v740, 0.0
    %759 = vadd.xlane.f32.xlu0 %v758
    %v760 = vpop.xlane.xlu0 %759
    %v761 = vsel %vm32, %v745, 0.0
    %762 = vadd.xlane.f32.xlu0 %v761
    %v763 = vpop.xlane.xlu0 %762
    %v764 = vsel %vm32, %v750, 0.0
    %765 = vadd.xlane.f32.xlu0 %v764
    %v766 = vpop.xlane.xlu0 %765
    %v767 = vsel %vm32, %v755, 0.0
    %768 = vadd.xlane.f32.xlu0 %v767
    %v769 = vpop.xlane.xlu0 %768
    %v770 = vrcp.pop 32.0
    %v771 = vmul.f32 %v760, %v770
    %v772 = vmul.f32 %v763, %v770
    %v773 = vmul.f32 %v766, %v770
    %v774 = vmul.f32 %v769, %v770
    %v775 = vsub.f32 %v740, %v771
    %v776 = vsub.f32 %v745, %v772
    %v777 = vsub.f32 %v750, %v773
    %v778 = vsub.f32 %v755, %v774
    %v779 = vmul.f32 %v775, %v775
    %v780 = vmul.f32 %v776, %v776
    %v781 = vmul.f32 %v777, %v777
    %v782 = vmul.f32 %v778, %v778
    %v783 = vsel %vm32, %v779, 0.0
    %784 = vadd.xlane.f32.xlu0 %v783
    %v785 = vpop.xlane.xlu0 %784
    %v786 = vsel %vm32, %v780, 0.0
    %787 = vadd.xlane.f32.xlu0 %v786
    %v788 = vpop.xlane.xlu0 %787
    %v789 = vsel %vm32, %v781, 0.0
    %790 = vadd.xlane.f32.xlu0 %v789
    %v791 = vpop.xlane.xlu0 %790
    %v792 = vsel %vm32, %v782, 0.0
    %793 = vadd.xlane.f32.xlu0 %v792
    %v794 = vpop.xlane.xlu0 %793
    %v795 = vmul.f32 %v785, %v770
    %v796 = vmul.f32 %v788, %v770
    %v797 = vmul.f32 %v791, %v770
    %v798 = vmul.f32 %v794, %v770
    %v799 = vadd.f32 %v795, 1e-05
    %v800 = vadd.f32 %v796, 1e-05
    %v801 = vadd.f32 %v797, 1e-05
    %v802 = vadd.f32 %v798, 1e-05
    %v803 = vrsqrt.pop %v799
    %v804 = vrsqrt.pop %v800
    %v805 = vrsqrt.pop %v801
    %v806 = vrsqrt.pop %v802
    %v807 = vmul.f32 %v775, %v803
    %v808 = vmul.f32 %v776, %v804
    %v809 = vmul.f32 %v777, %v805
    %v810 = vmul.f32 %v778, %v806
    %v811 = vlaneseq
    %v812 = vshrl.u32 %v811, 7
    %v813 = vsub.s32 0, %v812
    %v814 = vrot.slane %v28, %v813
    %816 = vrot.lane.b32.xlu0 %v814, 32
    %v817 = vpop.permute.xlu0 %816
    %v819 = vmul.f32 %v807, %v817
    %v820 = vmul.f32 %v808, %v817
    %v821 = vmul.f32 %v809, %v817
    %v822 = vmul.f32 %v810, %v817
    %v823 = vlaneseq
    %v824 = vshrl.u32 %v823, 7
    %v825 = vsub.s32 1, %v824
    %v826 = vrot.slane %v28, %v825
    %828 = vrot.lane.b32.xlu0 %v826, 32
    %v829 = vpop.permute.xlu0 %828
    %v831 = vadd.f32 %v819, %v829
    %v832 = vadd.f32 %v820, %v829
    %v833 = vadd.f32 %v821, %v829
    %v834 = vadd.f32 %v822, %v829
    %839 = vrot.lane.b32.xlu0 %v831, 32
    %v840 = vpop.permute.xlu0 %839
    %841 = vrot.lane.b32.xlu0 %v832, 32
    %v842 = vpop.permute.xlu0 %841
    %843 = vrot.lane.b32.xlu0 %v833, 32
    %v844 = vpop.permute.xlu0 %843
    %845 = vrot.lane.b32.xlu0 %v834, 32
    %v846 = vpop.permute.xlu0 %845
    %v851 = vsel %vm32, %v12, %v840
    %v852 = vsel %vm32, %v13, %v842
    %v853 = vsel %vm32, %v14, %v844
    %v854 = vsel %vm32, %v15, %v846
    %v856 = vsel %vm519, %v851, 0
    %v859 = vsel %vm519, %v852, 0
    %v862 = vsel %vm519, %v853, 0
    %v865 = vsel %vm519, %v854, 0
    %867 = vmatprep.subr.mxu0 0.0
    %868 = vmatpush1.msra.mxu0 %v20
    %869 = vmatprep.subr.mxu0 0.0
    %870 = vmatpush1.msra.mxu0 %v21
    %871 = vmatprep.subr.mxu0 0.0
    %872 = vmatpush1.msra.mxu0 %v22
    %873 = vmatprep.subr.mxu0 0.0
    %874 = vmatpush1.msra.mxu0 %v23
    %875 = vmatprep.subr.mxu0 0.0
    %876 = vmatpush1.msra.mxu0 %v24
    %877 = vmatprep.subr.mxu0 0.0
    %878 = vmatpush1.msra.mxu0 %v25
    %879 = vmatprep.subr.mxu0 0.0
    %880 = vmatpush1.msra.mxu0 %v26
    %881 = vmatprep.subr.mxu0 0.0
    %882 = vmatpush1.msra.mxu0 %v27
    %883 = vmatprep.subr.mxu0 0.0
    %884 = vmatpush1.msra.mxu0 0.0
    %885 = vmatprep.subr.mxu0 0.0
    %886 = vmatpush1.msra.mxu0 0.0
    %887 = vmatprep.subr.mxu0 0.0
    %888 = vmatpush1.msra.mxu0 0.0
    %889 = vmatprep.subr.mxu0 0.0
    %890 = vmatpush1.msra.mxu0 0.0
    %891 = vmatprep.subr.mxu0 0.0
    %892 = vmatpush1.msra.mxu0 0.0
    %893 = vmatprep.subr.mxu0 0.0
    %894 = vmatpush1.msra.mxu0 0.0
    %895 = vmatprep.subr.mxu0 0.0
    %896 = vmatpush1.msra.mxu0 0.0
    %897 = vmatprep.subr.mxu0 0.0
    %898 = vmatpush1.msra.mxu0 0.0
    %899 = vmatprep.subr.mxu0 0.0
    %900 = vmatpush1.msra.mxu0 0.0
    %901 = vmatprep.subr.mxu0 0.0
    %902 = vmatpush1.msra.mxu0 0.0
    %903 = vmatprep.subr.mxu0 0.0
    %904 = vmatpush1.msra.mxu0 0.0
    %905 = vmatprep.subr.mxu0 0.0
    %906 = vmatpush1.msra.mxu0 0.0
    %907 = vmatprep.subr.mxu0 0.0
    %908 = vmatpush1.msra.mxu0 0.0
    %909 = vmatprep.subr.mxu0 0.0
    %910 = vmatpush1.msra.mxu0 0.0
    %911 = vmatprep.subr.mxu0 0.0
    %912 = vmatpush1.msra.mxu0 0.0
    %913 = vmatprep.subr.mxu0 0.0
    %914 = vmatpush1.msra.mxu0 0.0
    %915 = vmatprep.subr.mxu0 0.0
    %916 = vmatpush1.msra.mxu0 0.0
    %917 = vmatprep.subr.mxu0 0.0
    %918 = vmatpush1.msra.mxu0 0.0
    %919 = vmatprep.subr.mxu0 0.0
    %920 = vmatpush1.msra.mxu0 0.0
    %921 = vmatprep.subr.mxu0 0.0
    %922 = vmatpush1.msra.mxu0 0.0
    %923 = vmatprep.subr.mxu0 0.0
    %924 = vmatpush1.msra.mxu0 0.0
    %925 = vmatprep.subr.mxu0 0.0
    %926 = vmatpush1.msra.mxu0 0.0
    %927 = vmatprep.subr.mxu0 0.0
    %928 = vmatpush1.msra.mxu0 0.0
    %929 = vmatprep.subr.mxu0 0.0
    %930 = vmatpush1.msra.mxu0 0.0
    %931 = vmatprep.mubr.f32.mxu0 0.0
    %932 = vmatmul.mubr.f32.gmra.mrb[0].mxu0 %v856
    %v933 = vpop.f32.mrb[0].mxu0
    %v934 = vadd.f32 0.0, %v933
    %v935 = vpop.f32.mrb[0].mxu0
    %936 = vmatprep.mubr.f32.mxu0 0.0
    %937 = vmatmul.mubr.f32.gmra.mrb[0].mxu0 %v859
    %v938 = vpop.f32.mrb[0].mxu0
    %v939 = vadd.f32 0.0, %v938
    %v940 = vpop.f32.mrb[0].mxu0
    %941 = vmatprep.mubr.f32.mxu0 0.0
    %942 = vmatmul.mubr.f32.gmra.mrb[0].mxu0 %v862
    %v943 = vpop.f32.mrb[0].mxu0
    %v944 = vadd.f32 0.0, %v943
    %v945 = vpop.f32.mrb[0].mxu0
    %946 = vmatprep.mubr.f32.mxu0 0.0
    %947 = vmatmul.mubr.f32.gmra.mrb[0].mxu0 %v865
    %v948 = vpop.f32.mrb[0].mxu0
    %v949 = vadd.f32 0.0, %v948
    %v950 = vpop.f32.mrb[0].mxu0
    %951 = vdwg.mxu0
    %v952 = vmax.f32 %v934, 0.0
    %v953 = vmax.f32 %v939, 0.0
    %v954 = vmax.f32 %v944, 0.0
    %v955 = vmax.f32 %v949, 0.0
    %956 = vrot.lane.b32.xlu0 %v20, 64
    %v957 = vpop.permute.xlu0 %956
    %958 = vrot.lane.b32.xlu0 %v21, 64
    %v959 = vpop.permute.xlu0 %958
    %960 = vrot.lane.b32.xlu0 %v22, 64
    %v961 = vpop.permute.xlu0 %960
    %962 = vrot.lane.b32.xlu0 %v23, 64
    %v963 = vpop.permute.xlu0 %962
    %964 = vrot.lane.b32.xlu0 %v24, 64
    %v965 = vpop.permute.xlu0 %964
    %966 = vrot.lane.b32.xlu0 %v25, 64
    %v967 = vpop.permute.xlu0 %966
    %968 = vrot.lane.b32.xlu0 %v26, 64
    %v969 = vpop.permute.xlu0 %968
    %970 = vrot.lane.b32.xlu0 %v27, 64
    %v971 = vpop.permute.xlu0 %970
    %v981 = vsel %vm519, %v952, 0
    %v984 = vsel %vm519, %v953, 0
    %v987 = vsel %vm519, %v954, 0
    %v990 = vsel %vm519, %v955, 0
    %992 = vmatprep.subr.mxu0 0.0
    %993 = vmatpush1.msra.mxu0 %v957
    %994 = vmatprep.subr.mxu0 0.0
    %995 = vmatpush1.msra.mxu0 %v959
    %996 = vmatprep.subr.mxu0 0.0
    %997 = vmatpush1.msra.mxu0 %v961
    %998 = vmatprep.subr.mxu0 0.0
    %999 = vmatpush1.msra.mxu0 %v963
    %1000 = vmatprep.subr.mxu0 0.0
    %1001 = vmatpush1.msra.mxu0 %v965
    %1002 = vmatprep.subr.mxu0 0.0
    %1003 = vmatpush1.msra.mxu0 %v967
    %1004 = vmatprep.subr.mxu0 0.0
    %1005 = vmatpush1.msra.mxu0 %v969
    %1006 = vmatprep.subr.mxu0 0.0
    %1007 = vmatpush1.msra.mxu0 %v971
    %1008 = vmatprep.subr.mxu0 0.0
    %1009 = vmatpush1.msra.mxu0 0.0
    %1010 = vmatprep.subr.mxu0 0.0
    %1011 = vmatpush1.msra.mxu0 0.0
    %1012 = vmatprep.subr.mxu0 0.0
    %1013 = vmatpush1.msra.mxu0 0.0
    %1014 = vmatprep.subr.mxu0 0.0
    %1015 = vmatpush1.msra.mxu0 0.0
    %1016 = vmatprep.subr.mxu0 0.0
    %1017 = vmatpush1.msra.mxu0 0.0
    %1018 = vmatprep.subr.mxu0 0.0
    %1019 = vmatpush1.msra.mxu0 0.0
    %1020 = vmatprep.subr.mxu0 0.0
    %1021 = vmatpush1.msra.mxu0 0.0
    %1022 = vmatprep.subr.mxu0 0.0
    %1023 = vmatpush1.msra.mxu0 0.0
    %1024 = vmatprep.subr.mxu0 0.0
    %1025 = vmatpush1.msra.mxu0 0.0
    %1026 = vmatprep.subr.mxu0 0.0
    %1027 = vmatpush1.msra.mxu0 0.0
    %1028 = vmatprep.subr.mxu0 0.0
    %1029 = vmatpush1.msra.mxu0 0.0
    %1030 = vmatprep.subr.mxu0 0.0
    %1031 = vmatpush1.msra.mxu0 0.0
    %1032 = vmatprep.subr.mxu0 0.0
    %1033 = vmatpush1.msra.mxu0 0.0
    %1034 = vmatprep.subr.mxu0 0.0
    %1035 = vmatpush1.msra.mxu0 0.0
    %1036 = vmatprep.subr.mxu0 0.0
    %1037 = vmatpush1.msra.mxu0 0.0
    %1038 = vmatprep.subr.mxu0 0.0
    %1039 = vmatpush1.msra.mxu0 0.0
    %1040 = vmatprep.subr.mxu0 0.0
    %1041 = vmatpush1.msra.mxu0 0.0
    %1042 = vmatprep.subr.mxu0 0.0
    %1043 = vmatpush1.msra.mxu0 0.0
    %1044 = vmatprep.subr.mxu0 0.0
    %1045 = vmatpush1.msra.mxu0 0.0
    %1046 = vmatprep.subr.mxu0 0.0
    %1047 = vmatpush1.msra.mxu0 0.0
    %1048 = vmatprep.subr.mxu0 0.0
    %1049 = vmatpush1.msra.mxu0 0.0
    %1050 = vmatprep.subr.mxu0 0.0
    %1051 = vmatpush1.msra.mxu0 0.0
    %1052 = vmatprep.subr.mxu0 0.0
    %1053 = vmatpush1.msra.mxu0 0.0
    %1054 = vmatprep.subr.mxu0 0.0
    %1055 = vmatpush1.msra.mxu0 0.0
    %1056 = vmatprep.mubr.f32.mxu0 0.0
    %1057 = vmatmul.mubr.f32.gmra.mrb[0].mxu0 %v981
    %v1058 = vpop.f32.mrb[0].mxu0
    %v1059 = vadd.f32 0.0, %v1058
    %v1060 = vpop.f32.mrb[0].mxu0
    %1061 = vmatprep.mubr.f32.mxu0 0.0
    %1062 = vmatmul.mubr.f32.gmra.mrb[0].mxu0 %v984
    %v1063 = vpop.f32.mrb[0].mxu0
    %v1064 = vadd.f32 0.0, %v1063
    %v1065 = vpop.f32.mrb[0].mxu0
    %1066 = vmatprep.mubr.f32.mxu0 0.0
    %1067 = vmatmul.mubr.f32.gmra.mrb[0].mxu0 %v987
    %v1068 = vpop.f32.mrb[0].mxu0
    %v1069 = vadd.f32 0.0, %v1068
    %v1070 = vpop.f32.mrb[0].mxu0
    %1071 = vmatprep.mubr.f32.mxu0 0.0
    %1072 = vmatmul.mubr.f32.gmra.mrb[0].mxu0 %v990
    %v1073 = vpop.f32.mrb[0].mxu0
    %v1074 = vadd.f32 0.0, %v1073
    %v1075 = vpop.f32.mrb[0].mxu0
    %1076 = vdwg.mxu0
    %v1077 = vsel %vm32, %v1059, 0.0
    %1078 = vadd.xlane.f32.xlu0 %v1077
    %v1079 = vpop.xlane.xlu0 %1078
    %v1080 = vsel %vm32, %v1064, 0.0
    %1081 = vadd.xlane.f32.xlu0 %v1080
    %v1082 = vpop.xlane.xlu0 %1081
    %v1083 = vsel %vm32, %v1069, 0.0
    %1084 = vadd.xlane.f32.xlu0 %v1083
    %v1085 = vpop.xlane.xlu0 %1084
    %v1086 = vsel %vm32, %v1074, 0.0
    %1087 = vadd.xlane.f32.xlu0 %v1086
    %v1088 = vpop.xlane.xlu0 %1087
    %v1089 = vmul.f32 %v1079, %v770
    %v1090 = vmul.f32 %v1082, %v770
    %v1091 = vmul.f32 %v1085, %v770
    %v1092 = vmul.f32 %v1088, %v770
    %v1093 = vsub.f32 %v1059, %v1089
    %v1094 = vsub.f32 %v1064, %v1090
    %v1095 = vsub.f32 %v1069, %v1091
    %v1096 = vsub.f32 %v1074, %v1092
    %v1097 = vmul.f32 %v1093, %v1093
    %v1098 = vmul.f32 %v1094, %v1094
    %v1099 = vmul.f32 %v1095, %v1095
    %v1100 = vmul.f32 %v1096, %v1096
    %v1101 = vsel %vm32, %v1097, 0.0
    %1102 = vadd.xlane.f32.xlu0 %v1101
    %v1103 = vpop.xlane.xlu0 %1102
    %v1104 = vsel %vm32, %v1098, 0.0
    %1105 = vadd.xlane.f32.xlu0 %v1104
    %v1106 = vpop.xlane.xlu0 %1105
    %v1107 = vsel %vm32, %v1099, 0.0
    %1108 = vadd.xlane.f32.xlu0 %v1107
    %v1109 = vpop.xlane.xlu0 %1108
    %v1110 = vsel %vm32, %v1100, 0.0
    %1111 = vadd.xlane.f32.xlu0 %v1110
    %v1112 = vpop.xlane.xlu0 %1111
    %v1113 = vmul.f32 %v1103, %v770
    %v1114 = vmul.f32 %v1106, %v770
    %v1115 = vmul.f32 %v1109, %v770
    %v1116 = vmul.f32 %v1112, %v770
    %v1117 = vadd.f32 %v1113, 1e-05
    %v1118 = vadd.f32 %v1114, 1e-05
    %v1119 = vadd.f32 %v1115, 1e-05
    %v1120 = vadd.f32 %v1116, 1e-05
    %v1121 = vrsqrt.pop %v1117
    %v1122 = vrsqrt.pop %v1118
    %v1123 = vrsqrt.pop %v1119
    %v1124 = vrsqrt.pop %v1120
    %v1125 = vmul.f32 %v1093, %v1121
    %v1126 = vmul.f32 %v1094, %v1122
    %v1127 = vmul.f32 %v1095, %v1123
    %v1128 = vmul.f32 %v1096, %v1124
    %v1129 = vlaneseq
    %v1130 = vshrl.u32 %v1129, 7
    %v1131 = vsub.s32 2, %v1130
    %v1132 = vrot.slane %v28, %v1131
    %1134 = vrot.lane.b32.xlu0 %v1132, 32
    %v1135 = vpop.permute.xlu0 %1134
    %v1137 = vmul.f32 %v1125, %v1135
    %v1138 = vmul.f32 %v1126, %v1135
    %v1139 = vmul.f32 %v1127, %v1135
    %v1140 = vmul.f32 %v1128, %v1135
    %v1141 = vlaneseq
    %v1142 = vshrl.u32 %v1141, 7
    %v1143 = vsub.s32 3, %v1142
    %v1144 = vrot.slane %v28, %v1143
    %1146 = vrot.lane.b32.xlu0 %v1144, 32
    %v1147 = vpop.permute.xlu0 %1146
    %v1149 = vadd.f32 %v1137, %v1147
    %v1150 = vadd.f32 %v1138, %v1147
    %v1151 = vadd.f32 %v1139, %v1147
    %v1152 = vadd.f32 %v1140, %v1147
    %v1153 = vadd.f32 %v12, %v1149
    %v1154 = vadd.f32 %v13, %v1150
    %v1155 = vadd.f32 %v14, %v1151
    %v1156 = vadd.f32 %v15, %v1152
    %1157 = vst.msk [vmem:[#allocation2] sm:$0xff] %vm32, %v1153
    %1158 = vst.msk [vmem:[#allocation2 + $0x8] sm:$0xff] %vm32, %v1154
    %1159 = vst.msk [vmem:[#allocation2 + $0x10] sm:$0xff] %vm32, %v1155
    %1160 = vst.msk [vmem:[#allocation2 + $0x18] sm:$0xff] %vm32, %v1156
    // Predicated region
    $region10: #{tpu_custom_call.1} parent=1 // pred_check
      _
    $region11: #{tpu_custom_call.1} parent=1 // pred_check_branch
      %1162 = sbr.rel (0) target = $region13
    $region12: #{tpu_custom_call.1} parent=1 // pred_region
      %s1164 = ssub.s32 512, 512
      %1165 = vsyncadd [#allocation3], %s1164
      %s1166 = sshll.u32 [#allocation2], 4
      %s1167 = int_to_ptr.vmem [resolvable:$true] %s1166
      %1172 = dma.vmem_to_hbm [thread:$0]  %s1167, 512, %s2, [#allocation3], 128, 128, 8
    $region13: #{tpu_custom_call.1} parent=1 // pred_fallthru
      _
    // Predicated region
    $region14: #{tpu_custom_call.1} parent=1 // pred_check
      _
    $region15: #{tpu_custom_call.1} parent=1 // pred_check_branch
      %1174 = sbr.rel (0) target = $region17
    $region16: #{tpu_custom_call.1} parent=1 // pred_region
      %1175 = dma.done [#allocation3], 512
    $region17: #{tpu_custom_call.1} parent=1 // pred_fallthru
      _
    %1176 = vsyncpa [#allocation3], 1

</llo_original>
